<compile_context>
chip_gen: v6e
topology: v6e:2x2x1
jax: 0.10.0
libtpu: 0.0.40
codegen_flags: <defaults>
</compile_context>

<pallas_src>
import functools

import jax
import jax.numpy as jnp
from jax import lax
from jax.experimental import pallas as pl
from jax.experimental.pallas import tpu as pltpu


def _pool_kernel(x_ref, o_ref, *, k: int, n_iter: int, largest: bool):
    """Per-row mean of the k largest values along the last axis.

    Two trace-time modes:
      largest=True : extract the max n_iter (= k) times.
      largest=False: row_sum minus the n_iter (= S - k) smallest values
                     (cheaper when k > S/2).
    Duplicates are handled by counting every occurrence of the current
    extremum and crediting min(count, remaining) at once, which matches
    torch.sort(...)[..., -k:].mean() exactly while avoiding any per-element
    index (iota) bookkeeping.
    """
    x = x_ref[...]
    # Keep bf16 on the compare/mask path (bf16 VPU on v6e/v7x); upcast other
    # dtypes.  Accumulation is always f32.
    if x.dtype != jnp.float32 and x.dtype != jnp.bfloat16:
        x = x.astype(jnp.float32)
    rows = x.shape[0]
    f32 = jnp.float32

    if largest:
        mask_val = jnp.array(-jnp.inf, dtype=x.dtype)
        reduce_fn = lambda v: jnp.max(v, axis=1, keepdims=True)
        base = None
    else:
        mask_val = jnp.array(jnp.inf, dtype=x.dtype)
        reduce_fn = lambda v: jnp.min(v, axis=1, keepdims=True)
        base = jnp.sum(x.astype(f32), axis=1, keepdims=True)   # before the loop

    def body(_, carry):
        xc, acc, rem = carry
        m = reduce_fn(xc)                                       # (rows, 1)
        is_m = xc == m                                          # (rows, S)
        cnt = jnp.sum(is_m.astype(f32), axis=1, keepdims=True)  # (rows, 1)
        take = jnp.minimum(cnt, rem)
        # Guard: once rem hits 0 a row may be fully masked (m = +/-inf);
        # the where keeps 0 * inf from producing NaN.
        acc = acc + jnp.where(take > 0.0, m.astype(f32), 0.0) * take
        xc = jnp.where(is_m, mask_val, xc)
        return xc, acc, rem - take

    acc = jnp.zeros((rows, 1), f32)
    if n_iter > 0:
        rem0 = jnp.full((rows, 1), float(n_iter), f32)
        _, acc, _ = lax.fori_loop(0, n_iter, body, (x, acc, rem0),
                                  unroll=True if n_iter <= 8 else False)

    total = acc if largest else (base - acc)
    o_ref[...] = (total * (1.0 / k)).astype(o_ref.dtype)


def _choose_tile_r(S: int, itemsize: int, work_itemsize: int) -> int:
    """Largest row tile (multiple of 8) whose VMEM footprint fits the budget."""
    # Per tile row: double-buffered input block + ~4 live (tile, S) temporaries
    # inside the extraction loop.  Conservative so it also fits v7x's smaller
    # scoped VMEM (32 MiB default of 64 MiB physical).
    per_row = S * (2 * itemsize + 4 * work_itemsize)
    budget = 16 * 1024 * 1024
    for cand in (1024, 512, 256, 128, 64, 32, 16, 8):
        if cand * per_row <= budget:
            return cand
    return 8


def topk_channel_pool2d(x: jax.Array, k: int) -> jax.Array:
    """Equivalent of TopKChannelPool2d(k).forward(x) for NCHW input."""
    N, C, H, W = x.shape
    S = H * W
    R = N * C
    # torch.sort(...)[:, :, -k:] silently clamps k to S; mirror that.
    k = int(max(1, min(int(k), S)))

    # When k is more than half of S it is cheaper to strip the (S - k)
    # smallest values from the row sum (halves worst-case iteration count).
    largest = k <= S - k
    n_iter = k if largest else S - k

    x2 = x.reshape(R, S)

    itemsize = x.dtype.itemsize
    work_itemsize = itemsize if x.dtype in (jnp.float32, jnp.bfloat16) else 4
    tile_r = _choose_tile_r(S, itemsize, work_itemsize)

    if R < 8:
        tile_r = R                          # block == full dim is always legal
    else:
        tile_r = min(tile_r, (R // 8) * 8)  # multiple of 8, never wider than R
    num_tiles = pl.cdiv(R, tile_r)          # ragged last block handled by Pallas

    out = pl.pallas_call(
        functools.partial(_pool_kernel, k=k, n_iter=n_iter, largest=largest),
        out_shape=jax.ShapeDtypeStruct((R, 1), x.dtype),
        grid_spec=pltpu.PrefetchScalarGridSpec(
            num_scalar_prefetch=0,
            grid=(num_tiles,),
            in_specs=[pl.BlockSpec((tile_r, S), lambda i: (i, 0))],
            out_specs=pl.BlockSpec((tile_r, 1), lambda i: (i, 0)),
        ),
        compiler_params=pltpu.CompilerParams(
            dimension_semantics=("parallel",),
            vmem_limit_bytes=32 * 1024 * 1024,
        ),
    )(x2)

    return out.reshape(N, C, 1, 1)


def _reference(x: jax.Array, k: int) -> jax.Array:
    """Pure-JAX reference mirroring the PyTorch module."""
    N, C, H, W = x.shape
    kk = max(1, min(int(k), H * W))
    flat = x.reshape(N, C, H * W)
    srt = jnp.sort(flat, axis=2)
    return jnp.mean(srt[:, :, -kk:], axis=2)[:, :, None, None]


if __name__ == "__main__":
    key = jax.random.PRNGKey(0)

    cases = [
        # (N, C, H, W), k, quantize-to-force-duplicates
        ((2, 4, 16, 16), 3, False),   # primary shape, small-k (max-extract) path
        ((2, 4, 16, 16), 3, True),    # heavy duplicate values
        ((2, 4, 4, 4), 12, False),    # k > S/2 -> strip-the-smallest path
        ((2, 4, 4, 4), 16, False),    # k == S  -> plain mean
        ((3, 5, 8, 8), 5, False),     # R = 15  -> ragged row tiling
    ]

    for i, (shape, k, quantize) in enumerate(cases):
        key, sub = jax.random.split(key)
        x = jax.random.normal(sub, shape, dtype=jnp.float32)
        if quantize:
            x = jnp.round(x * 2.0) * 0.5
        out = jax.block_until_ready(topk_channel_pool2d(x, k))
        ref = _reference(x, k)
        assert out.shape == (shape[0], shape[1], 1, 1), (i, out.shape)
        assert jnp.allclose(out, ref, atol=1e-5, rtol=1e-5), f"case {i} mismatch"

    print("KERNEL_OK")
</pallas_src>

<mosaic_0001>
module attributes {stable_mosaic.version = 11 : i64} {
  func.func @_pool_kernel(%arg0: i32, %arg1: memref<8x256xf32, #tpu.memory_space<vmem>>, %arg2: memref<8x1xf32, #tpu.memory_space<vmem>>) attributes {dimension_semantics = [#tpu.dimension_semantics<parallel>], iteration_bounds = array<i64: 1>, scalar_prefetch = 0 : i64, scratch_operands = 0 : i64, tpu.core_type = #tpu.core_type<tc>, window_params = [{transform_indices = @transform_0, window_bounds = array<i64: 8, 256>}, {transform_indices = @transform_1, window_bounds = array<i64: 8, 1>}]} {
    %c0 = arith.constant 0 : index
    %c0_0 = arith.constant 0 : index
    %0 = vector.load %arg1[%c0, %c0_0] : memref<8x256xf32, #tpu.memory_space<vmem>>, vector<8x256xf32>
    %cst = arith.constant 0.000000e+00 : f32
    %1 = vector.broadcast %cst : f32 to vector<8x1xf32>
    %cst_1 = arith.constant 3.000000e+00 : f32
    %2 = vector.broadcast %cst_1 : f32 to vector<8x1xf32>
    %cst_2 = arith.constant 0xFF800000 : f32
    %c0_i32 = arith.constant 0 : i32
    %cst_3 = arith.constant dense<0xFF800000> : vector<8xf32>
    %3 = vector.multi_reduction <maximumf>, %0, %cst_3 [1] : vector<8x256xf32> to vector<8xf32>
    %4 = vector.shape_cast %3 : vector<8xf32> to vector<8x1xf32>
    %5 = vector.broadcast %4 : vector<8x1xf32> to vector<8x256xf32>
    %6 = arith.cmpf oeq, %0, %5 : vector<8x256xf32>
    %7 = arith.extui %6 : vector<8x256xi1> to vector<8x256xi32>
    %8 = arith.sitofp %7 : vector<8x256xi32> to vector<8x256xf32>
    %cst_4 = arith.constant dense<0.000000e+00> : vector<8xf32>
    %9 = vector.multi_reduction <add>, %8, %cst_4 [1] : vector<8x256xf32> to vector<8xf32>
    %10 = vector.shape_cast %9 : vector<8xf32> to vector<8x1xf32>
    %11 = arith.minimumf %10, %2 : vector<8x1xf32>
    %cst_5 = arith.constant 0.000000e+00 : f32
    %12 = vector.broadcast %cst_5 : f32 to vector<8x1xf32>
    %13 = arith.cmpf ogt, %11, %12 : vector<8x1xf32>
    %cst_6 = arith.constant 0.000000e+00 : f32
    %14 = vector.broadcast %cst_6 : f32 to vector<8x1xf32>
    %15 = arith.select %13, %4, %14 : vector<8x1xi1>, vector<8x1xf32>
    %16 = arith.mulf %15, %11 : vector<8x1xf32>
    %17 = arith.addf %1, %16 : vector<8x1xf32>
    %18 = vector.broadcast %cst_2 : f32 to vector<8x256xf32>
    %19 = arith.select %6, %18, %0 : vector<8x256xi1>, vector<8x256xf32>
    %20 = arith.subf %2, %11 : vector<8x1xf32>
    %c1_i32 = arith.constant 1 : i32
    %cst_7 = arith.constant dense<0xFF800000> : vector<8xf32>
    %21 = vector.multi_reduction <maximumf>, %19, %cst_7 [1] : vector<8x256xf32> to vector<8xf32>
    %22 = vector.shape_cast %21 : vector<8xf32> to vector<8x1xf32>
    %23 = vector.broadcast %22 : vector<8x1xf32> to vector<8x256xf32>
    %24 = arith.cmpf oeq, %19, %23 : vector<8x256xf32>
    %25 = arith.extui %24 : vector<8x256xi1> to vector<8x256xi32>
    %26 = arith.sitofp %25 : vector<8x256xi32> to vector<8x256xf32>
    %cst_8 = arith.constant dense<0.000000e+00> : vector<8xf32>
    %27 = vector.multi_reduction <add>, %26, %cst_8 [1] : vector<8x256xf32> to vector<8xf32>
    %28 = vector.shape_cast %27 : vector<8xf32> to vector<8x1xf32>
    %29 = arith.minimumf %28, %20 : vector<8x1xf32>
    %cst_9 = arith.constant 0.000000e+00 : f32
    %30 = vector.broadcast %cst_9 : f32 to vector<8x1xf32>
    %31 = arith.cmpf ogt, %29, %30 : vector<8x1xf32>
    %cst_10 = arith.constant 0.000000e+00 : f32
    %32 = vector.broadcast %cst_10 : f32 to vector<8x1xf32>
    %33 = arith.select %31, %22, %32 : vector<8x1xi1>, vector<8x1xf32>
    %34 = arith.mulf %33, %29 : vector<8x1xf32>
    %35 = arith.addf %17, %34 : vector<8x1xf32>
    %36 = vector.broadcast %cst_2 : f32 to vector<8x256xf32>
    %37 = arith.select %24, %36, %19 : vector<8x256xi1>, vector<8x256xf32>
    %38 = arith.subf %20, %29 : vector<8x1xf32>
    %c2_i32 = arith.constant 2 : i32
    %cst_11 = arith.constant dense<0xFF800000> : vector<8xf32>
    %39 = vector.multi_reduction <maximumf>, %37, %cst_11 [1] : vector<8x256xf32> to vector<8xf32>
    %40 = vector.shape_cast %39 : vector<8xf32> to vector<8x1xf32>
    %41 = vector.broadcast %40 : vector<8x1xf32> to vector<8x256xf32>
    %42 = arith.cmpf oeq, %37, %41 : vector<8x256xf32>
    %43 = arith.extui %42 : vector<8x256xi1> to vector<8x256xi32>
    %44 = arith.sitofp %43 : vector<8x256xi32> to vector<8x256xf32>
    %cst_12 = arith.constant dense<0.000000e+00> : vector<8xf32>
    %45 = vector.multi_reduction <add>, %44, %cst_12 [1] : vector<8x256xf32> to vector<8xf32>
    %46 = vector.shape_cast %45 : vector<8xf32> to vector<8x1xf32>
    %47 = arith.minimumf %46, %38 : vector<8x1xf32>
    %cst_13 = arith.constant 0.000000e+00 : f32
    %48 = vector.broadcast %cst_13 : f32 to vector<8x1xf32>
    %49 = arith.cmpf ogt, %47, %48 : vector<8x1xf32>
    %cst_14 = arith.constant 0.000000e+00 : f32
    %50 = vector.broadcast %cst_14 : f32 to vector<8x1xf32>
    %51 = arith.select %49, %40, %50 : vector<8x1xi1>, vector<8x1xf32>
    %52 = arith.mulf %51, %47 : vector<8x1xf32>
    %53 = arith.addf %35, %52 : vector<8x1xf32>
    %54 = vector.broadcast %cst_2 : f32 to vector<8x256xf32>
    %55 = arith.select %42, %54, %37 : vector<8x256xi1>, vector<8x256xf32>
    %56 = arith.subf %38, %47 : vector<8x1xf32>
    %cst_15 = arith.constant 0.333333343 : f32
    %57 = vector.broadcast %cst_15 : f32 to vector<8x1xf32>
    %58 = arith.mulf %53, %57 : vector<8x1xf32>
    %c0_16 = arith.constant 0 : index
    %c0_17 = arith.constant 0 : index
    %59 = vector.load %arg2[%c0_16, %c0_17] : memref<8x1xf32, #tpu.memory_space<vmem>>, vector<8x1xf32>
    tpu.vector_store %arg2[%c0_16, %c0_17], %58 {strides = array<i32>} : memref<8x1xf32, #tpu.memory_space<vmem>>, vector<8x1xf32>,
    return
  }
  func.func @transform_0(%arg0: i32) -> (i32, i32) {
    %c0_i32 = arith.constant 0 : i32
    %c0_i32_0 = arith.constant 0 : i32
    return %arg0, %c0_i32 : i32, i32
  }
  func.func @transform_1(%arg0: i32) -> (i32, i32) {
    %c0_i32 = arith.constant 0 : i32
    %c0_i32_0 = arith.constant 0 : i32
    return %arg0, %c0_i32 : i32, i32
  }
}

</mosaic_0001>

<llo_original>
// kernel: tpu_custom_call.1
$region0: #{tpu_custom_call.1}
  #allocation0 [shape = 'u32[]', space=smem, size = 0x4, offset = 0x4, fixed_abs, tag = 'smem constant byte address 0x4 - core index']
  #allocation1 [shape = 'u32[144,128]{1,0:T(1,128)}', space=vmem, size = 0x12000, scoped, tag = 'internal scratch']
  %s0 = inlined_call_operand.hbm [shape: f32[8,256], index: 0, kind: input, shape index: {}]
  %s1 = inlined_call_operand.vmem [shape: f32[8,1], index: 1, kind: output, shape index: {}]
  %s2 = sld [smem:[#allocation0]]
  $region18: #{tpu_custom_call.1} parent=0
    _
  %s4 = ssub.s32 1, %s2
  %s5 = scalar_select 0, %s4, %s2
  $region1: #{tpu_custom_call.1} parent=0
    #allocation2 [shape = 'u8[8192]{0}', space=vmem, size = 0x2000, scoped, tag = 'input window, operand 0, single buffered']
    #allocation3 [shape = 's32[1]{0}', space=sflag, size = 0x4, scoped, tag = 'scoped memory for tpu_custom_call.1']
    %6 = vsyncpa [#allocation3], 0
    // Predicated region
    $region2: #{tpu_custom_call.1} parent=1 // pred_check
      _
    $region3: #{tpu_custom_call.1} parent=1 // pred_check_branch
      %8 = sbr.rel (0) target = $region5
    $region4: #{tpu_custom_call.1} parent=1 // pred_region
      %s10 = ssub.s32 256, 256
      %11 = vsyncadd [#allocation3], %s10
      %s13 = sshll.u32 [#allocation2], 4
      %s14 = int_to_ptr.vmem [resolvable:$true] %s13
      %16 = dma.hbm_to_vmem [thread:$0]  %s0, 256, %s14, [#allocation3]
    $region5: #{tpu_custom_call.1} parent=1 // pred_fallthru
      _
    // Predicated region
    $region6: #{tpu_custom_call.1} parent=1 // pred_check
      _
    $region7: #{tpu_custom_call.1} parent=1 // pred_check_branch
      %18 = sbr.rel (0) target = $region9
    $region8: #{tpu_custom_call.1} parent=1 // pred_region
      %19 = dma.done [#allocation3], 256
    $region9: #{tpu_custom_call.1} parent=1 // pred_fallthru
      _
    %v20 = vld [vmem:[#allocation2] sm:$0xff]
    %v21 = vld [vmem:[#allocation2 + $0x8] sm:$0xff]
    %v22 = vmax.f32 %v20, %v21
    %23 = vmax.xlane.f32.xlu0 %v22
    %v24 = vpop.xlane.xlu0 %23
    %vm25 = vcmp.eq.f32.partialorder %v20, %v24
    %vm26 = vcmp.eq.f32.partialorder %v21, %v24
    %v27 = vsel %vm25, 1, 0
    %v28 = vsel %vm26, 1, 0
    %v29 = vcvt.s32.f32 %v27
    %v30 = vcvt.s32.f32 %v28
    %v31 = vadd.f32 %v29, %v30
    %32 = vadd.xlane.f32.xlu0 %v31
    %v33 = vpop.xlane.xlu0 %32
    %v34 = vmin.f32 %v33, 3.0
    %vm35 = vcmp.gt.f32.partialorder %v34, 0.0
    %v36 = vsel %vm35, %v24, 0.0
    %v37 = vmul.f32 %v36, %v34
    %v38 = vadd.f32 %v37, 0.0
    %v39 = vsel %vm25, -inf, %v20
    %v40 = vsel %vm26, -inf, %v21
    %v41 = vsub.f32 3.0, %v34
    %v42 = vmax.f32 %v39, %v40
    %43 = vmax.xlane.f32.xlu0 %v42
    %v44 = vpop.xlane.xlu0 %43
    %vm45 = vcmp.eq.f32.partialorder %v39, %v44
    %vm46 = vcmp.eq.f32.partialorder %v40, %v44
    %v47 = vsel %vm45, 1, 0
    %v48 = vsel %vm46, 1, 0
    %v49 = vcvt.s32.f32 %v47
    %v50 = vcvt.s32.f32 %v48
    %v51 = vadd.f32 %v49, %v50
    %52 = vadd.xlane.f32.xlu0 %v51
    %v53 = vpop.xlane.xlu0 %52
    %v54 = vmin.f32 %v53, %v41
    %vm55 = vcmp.gt.f32.partialorder %v54, 0.0
    %v56 = vsel %vm55, %v44, 0.0
    %v57 = vmul.f32 %v56, %v54
    %v58 = vadd.f32 %v38, %v57
    %v59 = vsel %vm45, -inf, %v39
    %v60 = vsel %vm46, -inf, %v40
    %v61 = vsub.f32 %v41, %v54
    %v62 = vmax.f32 %v59, %v60
    %63 = vmax.xlane.f32.xlu0 %v62
    %v64 = vpop.xlane.xlu0 %63
    %vm65 = vcmp.eq.f32.partialorder %v59, %v64
    %vm66 = vcmp.eq.f32.partialorder %v60, %v64
    %v67 = vsel %vm65, 1, 0
    %v68 = vsel %vm66, 1, 0
    %v69 = vcvt.s32.f32 %v67
    %v70 = vcvt.s32.f32 %v68
    %v71 = vadd.f32 %v69, %v70
    %72 = vadd.xlane.f32.xlu0 %v71
    %v73 = vpop.xlane.xlu0 %72
    %v74 = vmin.f32 %v73, %v61
    %vm75 = vcmp.gt.f32.partialorder %v74, 0.0
    %v76 = vsel %vm75, %v64, 0.0
    %v77 = vmul.f32 %v76, %v74
    %v78 = vadd.f32 %v58, %v77
    %v79 = vmul.f32 %v78, 0.33333334
    %vm80 = vcmask 7168
    %81 = vst.msk [vmem:[%s1] sm:$0xff] %vm80, %v79
    // Predicated region
    $region10: #{tpu_custom_call.1} parent=1 // pred_check
      _
    $region11: #{tpu_custom_call.1} parent=1 // pred_check_branch
      %83 = sbr.rel (0) target = $region13
    $region12: #{tpu_custom_call.1} parent=1 // pred_region
      _
    $region13: #{tpu_custom_call.1} parent=1 // pred_fallthru
      _
    // Predicated region
    $region14: #{tpu_custom_call.1} parent=1 // pred_check
      _
    $region15: #{tpu_custom_call.1} parent=1 // pred_check_branch
      %85 = sbr.rel (0) target = $region17
    $region16: #{tpu_custom_call.1} parent=1 // pred_region
      _
    $region17: #{tpu_custom_call.1} parent=1 // pred_fallthru
      _
    %86 = vsyncpa [#allocation3], 1

</llo_original>
